<compile_context>
chip_gen: v5e
topology: v5e:2x2
jax: 0.10.0
libtpu: 0.0.40
codegen_flags: <defaults>
</compile_context>

<pallas_src>
import math

import jax
import jax.numpy as jnp
from jax.experimental import pallas as pl
from jax.experimental.pallas import tpu as pltpu

_LANE = 128
_SUBLANE = 8


def _cdiv(a, b):
    return -(-a // b)


def _round_up(x, m):
    return ((x + m - 1) // m) * m


def _pow_small_int(x, p: int):
    """x ** p for a small non-negative integer p via repeated multiplies."""
    if p == 0:
        return jnp.ones_like(x)
    r = x
    for _ in range(p - 1):
        r = r * x
    return r


def _focal_rows(logits_ref, side_ref, gamma: float):
    """Per-row focal term for the current (TN, C) tile -> (TN, 1) float32."""
    x = logits_ref[...].astype(jnp.float32)              # (TN, C)
    at = side_ref[:, 0:1]                                # (TN, 1) alpha[target]
    logit_t = side_ref[:, 1:2]                           # (TN, 1) logits[target]

    # numerically-stable cross entropy: ce = logsumexp(logits) - logits[target]
    m = jnp.max(x, axis=-1, keepdims=True)                               # (TN,1)
    lse = m + jnp.log(jnp.sum(jnp.exp(x - m), axis=-1, keepdims=True))   # (TN,1)
    ce = lse - logit_t                                                   # (TN,1)

    pt = jnp.exp(-ce)
    one_minus_pt = 1.0 - pt

    g = float(gamma)
    if g == int(g) and 0 <= int(g) <= 8:
        weight = _pow_small_int(one_minus_pt, int(g))    # VPU-only, safe at pt==1
    else:
        # ce can round to a tiny negative -> clamp before non-integer pow.
        weight = jnp.maximum(one_minus_pt, 0.0) ** g

    return at * weight * ce                              # (TN, 1)


def _mask_rows(focal, row0, n_total: int):
    row_ids = row0 + jax.lax.broadcasted_iota(jnp.int32, focal.shape, 0)
    return jnp.where(row_ids < n_total, focal, 0.0)


def _focal_reduce_kernel(gamma: float, tn: int, steps_per_core: int,
                         n_total: int):
    def kernel(logits_ref, side_ref, out_ref):
        ci = pl.program_id(0)      # core ("parallel") axis
        i = pl.program_id(1)       # step ("arbitrary") axis

        focal = _focal_rows(logits_ref, side_ref, gamma)
        focal = _mask_rows(focal, (ci * steps_per_core + i) * tn, n_total)

        @pl.when(i == 0)
        def _():
            out_ref[...] = jnp.zeros_like(out_ref)

        # Broadcast-add the tile's partial sum into this core's (8, 128)
        # accumulator block; the wrapper reads one element per core block.
        out_ref[...] += jnp.sum(focal)

    return kernel


def _focal_none_kernel(gamma: float, tn: int, n_total: int):
    def kernel(logits_ref, side_ref, out_ref):
        focal = _focal_rows(logits_ref, side_ref, gamma)
        out_ref[...] = _mask_rows(focal, pl.program_id(0) * tn, n_total)

    return kernel


def _pick_tile(n, c, itemsize, needs_row_output):
    """Row-tile size + VMEM limit from the chip's physical VMEM capacity."""
    try:
        vmem_cap = int(getattr(pltpu.get_tpu_info(), "vmem_capacity_bytes",
                               64 * 1024 * 1024))
    except Exception:
        vmem_cap = 64 * 1024 * 1024           # v7x per-TC physical VMEM
    # <= ~48 MiB on v7x (64 MiB physical), up to 96 MiB on v5e/v6e (128 MiB).
    vmem_limit = min(96 * 1024 * 1024, (vmem_cap * 3) // 4)

    # Per-row VMEM bytes (lane-padded to 128 lanes where relevant):
    lanes = _round_up(max(c, 1), _LANE)
    per_row = 2 * lanes * itemsize            # double-buffered logits tiles
    per_row += 3 * lanes * 4                  # in-kernel f32 temps (x, x-m, exp)
    per_row += 2 * _LANE * 4                  # (TN, 2) f32 side input, 2 buffers
    if needs_row_output:
        per_row += 2 * _LANE * 4              # (TN, 1) f32 output, 2 buffers

    budget = int(vmem_limit * 0.6)            # headroom for pipeline / regalloc
    tn = budget // max(1, per_row)
    tn = max(_SUBLANE, min(32768, (tn // _SUBLANE) * _SUBLANE))
    tn = min(tn, max(_SUBLANE, _round_up(n, _SUBLANE)))   # never exceed problem
    return tn, int(vmem_limit)


def focal_loss(logits, targets, alpha, gamma=2.0, reduction="mean",
               block_rows=None):
    """logits: (N, C) float/bf16, targets: (N,) int, alpha: (C,) float."""
    if reduction not in ("mean", "sum", "none"):
        raise ValueError(f"unsupported reduction: {reduction!r}")

    n, c = logits.shape
    targets = targets.astype(jnp.int32)

    # Hoist both per-row gathers out of the (N, C) hot path (trivial XLA
    # gathers touching only N elements) and merge them into ONE (N, 2) stream.
    at = jnp.take(alpha.astype(jnp.float32), targets, axis=0)
    logit_t = jnp.take_along_axis(logits, targets[:, None], axis=-1)[:, 0]
    side = jnp.stack([at, logit_t.astype(jnp.float32)], axis=-1)       # (N, 2)

    itemsize = jnp.dtype(logits.dtype).itemsize
    tn, vmem_limit = _pick_tile(n, c, itemsize, reduction == "none")
    if block_rows is not None:
        tn = max(_SUBLANE, (int(block_rows) // _SUBLANE) * _SUBLANE)

    if reduction in ("mean", "sum"):
        total_steps = _cdiv(n, tn)
        ncores = 2 if total_steps >= 2 else 1   # v7x megacore; harmless on 1 TC
        steps_per_core = _cdiv(total_steps, ncores)
        n_pad = ncores * steps_per_core * tn
    else:
        total_steps = _cdiv(n, tn)
        n_pad = total_steps * tn

    if n_pad != n:
        pad = n_pad - n
        logits = jnp.pad(logits, ((0, pad), (0, 0)))
        side = jnp.pad(side, ((0, pad), (0, 0)))

    if reduction in ("mean", "sum"):
        def block_map(ci, i):
            return (ci * steps_per_core + i, 0)

        out = pl.pallas_call(
            _focal_reduce_kernel(float(gamma), tn, steps_per_core, n),
            out_shape=jax.ShapeDtypeStruct((ncores * 8, 128), jnp.float32),
            grid=(ncores, steps_per_core),
            in_specs=[pl.BlockSpec((tn, c), block_map),     # logits tile
                      pl.BlockSpec((tn, 2), block_map)],    # [alpha_t, logit_t]
            out_specs=pl.BlockSpec((8, 128), lambda ci, i: (ci, 0)),
            compiler_params=pltpu.CompilerParams(
                dimension_semantics=("parallel", "arbitrary"),
                vmem_limit_bytes=vmem_limit),
        )(logits, side)
        total = jnp.sum(out[0::8, 0])           # one element per core block
        if reduction == "mean":
            total = total / jnp.float32(n)
        return total

    # reduction == "none": independent tiles, per-row output.
    out = pl.pallas_call(
        _focal_none_kernel(float(gamma), tn, n),
        out_shape=jax.ShapeDtypeStruct((n_pad, 1), jnp.float32),
        grid=(n_pad // tn,),
        in_specs=[pl.BlockSpec((tn, c), lambda i: (i, 0)),
                  pl.BlockSpec((tn, 2), lambda i: (i, 0))],
        out_specs=pl.BlockSpec((tn, 1), lambda i: (i, 0)),
        compiler_params=pltpu.CompilerParams(
            dimension_semantics=("parallel",),
            vmem_limit_bytes=vmem_limit),
    )(logits, side)
    return out[:n, 0]


def focal_loss_ref(logits, targets, alpha, gamma=2.0, reduction="mean"):
    """Pure-JAX reference matching the PyTorch module."""
    logits = logits.astype(jnp.float32)
    lse = jax.nn.logsumexp(logits, axis=-1)
    ce = lse - jnp.take_along_axis(logits, targets[:, None], axis=-1)[:, 0]
    pt = jnp.exp(-ce)
    at = alpha[targets]
    focal = at * (1.0 - pt) ** gamma * ce
    if reduction == "mean":
        return focal.mean()
    elif reduction == "sum":
        return focal.sum()
    return focal


if __name__ == "__main__":
    key = jax.random.PRNGKey(0)
    k1, k2, k3 = jax.random.split(key, 3)

    # N deliberately NOT a multiple of the 16-row tile so that the two-core
    # grid split, the in-kernel accumulation and the padded-row masking all run.
    N, C = 40, 4
    logits = jax.random.normal(k1, (N, C), dtype=jnp.float32)
    targets = jax.random.randint(k2, (N,), 0, C, dtype=jnp.int32)
    alpha = jax.random.uniform(k3, (C,), dtype=jnp.float32, minval=0.1, maxval=1.0)

    # mean (default in the PyTorch module), small tiles -> multi-step / 2-core path
    out_mean = focal_loss(logits, targets, alpha, gamma=2.0, reduction="mean",
                          block_rows=16)
    out_mean = jax.block_until_ready(out_mean)
    ref_mean = focal_loss_ref(logits, targets, alpha, gamma=2.0, reduction="mean")
    assert jnp.allclose(out_mean, ref_mean, rtol=1e-5, atol=1e-6), (out_mean, ref_mean)

    # mean with the automatic tile heuristic (single tile, single core)
    out_mean_auto = focal_loss(logits, targets, alpha, gamma=2.0, reduction="mean")
    out_mean_auto = jax.block_until_ready(out_mean_auto)
    assert jnp.allclose(out_mean_auto, ref_mean, rtol=1e-5, atol=1e-6), (out_mean_auto, ref_mean)

    # sum
    out_sum = focal_loss(logits, targets, alpha, gamma=2.0, reduction="sum",
                         block_rows=16)
    out_sum = jax.block_until_ready(out_sum)
    ref_sum = focal_loss_ref(logits, targets, alpha, gamma=2.0, reduction="sum")
    assert jnp.allclose(out_sum, ref_sum, rtol=1e-5, atol=1e-5), (out_sum, ref_sum)

    # none
    out_none = focal_loss(logits, targets, alpha, gamma=2.0, reduction="none",
                          block_rows=16)
    out_none = jax.block_until_ready(out_none)
    ref_none = focal_loss_ref(logits, targets, alpha, gamma=2.0, reduction="none")
    assert jnp.allclose(out_none, ref_none, rtol=1e-5, atol=1e-5)

    # non-integer gamma (exercises the clamped pow path)
    out_g = focal_loss(logits, targets, alpha, gamma=1.5, reduction="mean",
                       block_rows=16)
    out_g = jax.block_until_ready(out_g)
    ref_g = focal_loss_ref(logits, targets, alpha, gamma=1.5, reduction="mean")
    assert jnp.allclose(out_g, ref_g, rtol=1e-5, atol=1e-6), (out_g, ref_g)

    print("KERNEL_OK")
</pallas_src>

<mosaic_0001>
module attributes {stable_mosaic.version = 11 : i64} {
  func.func @kernel(%arg0: i32, %arg1: i32, %arg2: memref<16x4xf32, #tpu.memory_space<vmem>>, %arg3: memref<16x2xf32, #tpu.memory_space<vmem>>, %arg4: memref<8x128xf32, #tpu.memory_space<vmem>>) attributes {dimension_semantics = [#tpu.dimension_semantics<parallel>, #tpu.dimension_semantics<arbitrary>], iteration_bounds = array<i64: 2, 2>, scalar_prefetch = 0 : i64, scratch_operands = 0 : i64, tpu.core_type = #tpu.core_type<tc>, window_params = [{transform_indices = @transform_0, window_bounds = array<i64: 16, 4>}, {transform_indices = @transform_1, window_bounds = array<i64: 16, 2>}, {transform_indices = @transform_2, window_bounds = array<i64: 8, 128>}]} {
    %c0 = arith.constant 0 : index
    %c0_0 = arith.constant 0 : index
    %0 = vector.load %arg2[%c0, %c0_0] : memref<16x4xf32, #tpu.memory_space<vmem>>, vector<16x4xf32>
    %c0_1 = arith.constant 0 : index
    %c0_2 = arith.constant 0 : index
    %1 = vector.load %arg3[%c0_1, %c0_2] : memref<16x2xf32, #tpu.memory_space<vmem>>, vector<16x1xf32>
    %c0_3 = arith.constant 0 : index
    %c1 = arith.constant 1 : index
    %2 = vector.load %arg3[%c0_3, %c1] : memref<16x2xf32, #tpu.memory_space<vmem>>, vector<16x1xf32>
    %cst = arith.constant dense<0xFF800000> : vector<16xf32>
    %3 = vector.multi_reduction <maximumf>, %0, %cst [1] : vector<16x4xf32> to vector<16xf32>
    %4 = vector.shape_cast %3 : vector<16xf32> to vector<16x1xf32>
    %5 = vector.broadcast %4 : vector<16x1xf32> to vector<16x4xf32>
    %6 = arith.subf %0, %5 : vector<16x4xf32>
    %7 = math.exp %6 : vector<16x4xf32>
    %cst_4 = arith.constant dense<0.000000e+00> : vector<16xf32>
    %8 = vector.multi_reduction <add>, %7, %cst_4 [1] : vector<16x4xf32> to vector<16xf32>
    %9 = vector.shape_cast %8 : vector<16xf32> to vector<16x1xf32>
    %10 = math.log %9 : vector<16x1xf32>
    %11 = arith.addf %4, %10 : vector<16x1xf32>
    %12 = arith.subf %11, %2 : vector<16x1xf32>
    %cst_5 = arith.constant 0.000000e+00 : f32
    %13 = vector.broadcast %cst_5 : f32 to vector<16x1xf32>
    %14 = arith.subf %13, %12 : vector<16x1xf32>
    %15 = math.exp %14 : vector<16x1xf32>
    %cst_6 = arith.constant 1.000000e+00 : f32
    %16 = vector.broadcast %cst_6 : f32 to vector<16x1xf32>
    %17 = arith.subf %16, %15 : vector<16x1xf32>
    %18 = arith.mulf %17, %17 : vector<16x1xf32>
    %19 = arith.mulf %1, %18 : vector<16x1xf32>
    %20 = arith.mulf %19, %12 : vector<16x1xf32>
    %c2_i32 = arith.constant 2 : i32
    %21 = arith.muli %arg0, %c2_i32 : i32
    %22 = arith.addi %21, %arg1 : i32
    %c16_i32 = arith.constant 16 : i32
    %23 = arith.muli %22, %c16_i32 : i32
    %24 = tpu.iota {dimensions = array<i32: 0>} : vector<16x1xi32>
    %25 = vector.broadcast %23 : i32 to vector<16x1xi32>
    %26 = arith.addi %25, %24 : vector<16x1xi32>
    %c40_i32 = arith.constant 40 : i32
    %27 = vector.broadcast %c40_i32 : i32 to vector<16x1xi32>
    %28 = arith.cmpi slt, %26, %27 : vector<16x1xi32>
    %cst_7 = arith.constant 0.000000e+00 : f32
    %29 = vector.broadcast %cst_7 : f32 to vector<16x1xf32>
    %30 = arith.select %28, %20, %29 : vector<16x1xi1>, vector<16x1xf32>
    %c0_i32 = arith.constant 0 : i32
    %31 = arith.cmpi eq, %arg1, %c0_i32 : i32
    %32 = arith.extui %31 : i1 to i32
    %c0_i32_8 = arith.constant 0 : i32
    %33 = arith.cmpi ne, %32, %c0_i32_8 : i32
    scf.if %33 {
      %cst_14 = arith.constant 0.000000e+00 : f32
      %42 = vector.broadcast %cst_14 : f32 to vector<8x128xf32>
      %c0_15 = arith.constant 0 : index
      %c0_16 = arith.constant 0 : index
      %43 = vector.load %arg4[%c0_15, %c0_16] : memref<8x128xf32, #tpu.memory_space<vmem>>, vector<8x128xf32>
      tpu.vector_store %arg4[%c0_15, %c0_16], %42 {strides = array<i32>} : memref<8x128xf32, #tpu.memory_space<vmem>>, vector<8x128xf32>,
    } else {
    }
    %c0_9 = arith.constant 0 : index
    %c0_10 = arith.constant 0 : index
    %34 = vector.load %arg4[%c0_9, %c0_10] : memref<8x128xf32, #tpu.memory_space<vmem>>, vector<8x128xf32>
    %35 = vector.shape_cast %30 : vector<16x1xf32> to vector<1x16x1xf32>
    %cst_11 = arith.constant dense<0.000000e+00> : vector<1xf32>
    %36 = vector.multi_reduction <add>, %35, %cst_11 [1, 2] : vector<1x16x1xf32> to vector<1xf32>
    %37 = vector.shape_cast %36 : vector<1xf32> to vector<1x1x1xf32>
    %38 = vector.extract %37[0, 0, 0] : f32 from vector<1x1x1xf32>
    %39 = vector.broadcast %38 : f32 to vector<8x128xf32>
    %40 = arith.addf %34, %39 : vector<8x128xf32>
    %c0_12 = arith.constant 0 : index
    %c0_13 = arith.constant 0 : index
    %41 = vector.load %arg4[%c0_12, %c0_13] : memref<8x128xf32, #tpu.memory_space<vmem>>, vector<8x128xf32>
    tpu.vector_store %arg4[%c0_12, %c0_13], %40 {strides = array<i32>} : memref<8x128xf32, #tpu.memory_space<vmem>>, vector<8x128xf32>,
    return
  }
  func.func @transform_0(%arg0: i32, %arg1: i32) -> (i32, i32) {
    %c2_i32 = arith.constant 2 : i32
    %0 = arith.muli %arg0, %c2_i32 : i32
    %1 = arith.addi %0, %arg1 : i32
    %c0_i32 = arith.constant 0 : i32
    %c0_i32_0 = arith.constant 0 : i32
    return %1, %c0_i32 : i32, i32
  }
  func.func @transform_1(%arg0: i32, %arg1: i32) -> (i32, i32) {
    %c2_i32 = arith.constant 2 : i32
    %0 = arith.muli %arg0, %c2_i32 : i32
    %1 = arith.addi %0, %arg1 : i32
    %c0_i32 = arith.constant 0 : i32
    %c0_i32_0 = arith.constant 0 : i32
    return %1, %c0_i32 : i32, i32
  }
  func.func @transform_2(%arg0: i32, %arg1: i32) -> (i32, i32) {
    %c0_i32 = arith.constant 0 : i32
    %c0_i32_0 = arith.constant 0 : i32
    return %arg0, %c0_i32 : i32, i32
  }
}

</mosaic_0001>

<llo_original>
// kernel: tpu_custom_call.1
$region0: #{tpu_custom_call.1}
  #allocation0 [shape = 'u32[]', space=smem, size = 0x4, offset = 0x4, fixed_abs, tag = 'smem constant byte address 0x4 - core index']
  #allocation1 [shape = 'u32[72,128]{1,0:T(1,128)}', space=vmem, size = 0x9000, scoped, tag = 'internal scratch']
  %s0 = inlined_call_operand.vmem [shape: f32[64,4], index: 0, kind: input, shape index: {}]
  %s1 = inlined_call_operand.vmem [shape: f32[64,2], index: 1, kind: input, shape index: {}]
  %s2 = inlined_call_operand.hbm [shape: f32[16,128], index: 2, kind: output, shape index: {}]
  %s3 = sld [smem:[#allocation0]]
  $region45: #{tpu_custom_call.1} parent=0
    _
  %s5 = ssub.s32 1, %s3
  %s6 = scalar_select 0, %s5, %s3
  $region1: #{tpu_custom_call.1} parent=0
    #allocation2 [shape = 'u8[8192]{0}', space=vmem, size = 0x2000, scoped, tag = 'output window, operand 0']
    #allocation3 [shape = 's32[2]{0}', space=sflag, size = 0x8, scoped, tag = 'scoped memory for tpu_custom_call.1']
    %7 = vsyncpa [#allocation3], 0
    %s8 = scalar_lea.sflag [#allocation3], 1
    %9 = vsyncpa %s8, 0
    loop: start=0, step=1, limit=6
    $region2: #{tpu_custom_call.1} parent=1 // loop_pre_header
      _
    $region3: #{tpu_custom_call.1} parent=1 // loop_header
      %s11 = sphi 0, %s15
      %p12 = scmp.ge.s32.totalorder %s11, 6
      %s18 = sphi 0, %s30
      %s19 = sphi 0, %s26
      %s20 = sphi 0, %s18
      %s21 = sphi 0, %s19
      %s22 = sphi 0, %s20
      %s23 = sphi 0, %s21
      %s37 = sphi 0, %s39
      %s40 = sphi 0, %s37
      %s41 = sphi 0, %s40
      %s57 = sphi 0, %s41
      %s67 = sphi 0, %s69
      %s70 = sphi 0, %s67
      %s71 = sphi 0, %s70
      %s87 = sphi 0, %s71
      %s93 = sphi 0, %s95
      %s96 = sphi 0, %s93
      %s97 = sphi 0, %s96
      %s113 = sphi 0, %s97
    $region4: #{tpu_custom_call.1} parent=1 // loop_header_branch
      %14 = sbr.rel (%p12) target = $region8
    $region5: #{tpu_custom_call.1} parent=1 // loop_body
      %s16 = ssub.s32 %s11, 1
      %s17 = ssub.s32 %s11, 2
      %s24 = sadd.s32 1, %s19
      %p25 = scmp.ge.s32.totalorder %s24, 2
      %s26 = scalar_select %p25, 0, %s24
      %s27 = sadd.s32 1, %s18
      %s28 = scalar_select %p25, %s27, %s18
      %p29 = scmp.ge.s32.totalorder %s28, 2
      %s30 = scalar_select %p29, 0, %s28
      %s31 = smul.u32 %s18, 2
      %s32 = sadd.s32 %s31, %s19
      %s33 = smul.u32 %s30, 2
      %s34 = sadd.s32 %s33, %s26
      %s35 = ssub.s32 %s32, %s34
      %p36 = scmp.eq.s32.totalorder %s35, 0
      %s38 = sadd.s32 %s37, 1
      %s39 = scalar_select %p36, %s37, %s38
      %p42 = pneg %p36
      %p43 = scmp.eq.s32.totalorder %s11, 3
      %p44 = por %p42, %p43
      %p45 = scmp.ne.s32.totalorder %s37, %s40
      %p46 = scmp.eq.s32.totalorder %s11, 0
      %p47 = por %p45, %p46
      %p48 = scmp.ne.s32.totalorder %s37, %s40
      %p49 = scmp.eq.s32.totalorder %s16, 3
      %p50 = por %p48, %p49
      %p51 = scmp.ne.s32.totalorder %s40, %s41
      %p52 = scmp.eq.s32.totalorder %s16, 0
      %p53 = por %p51, %p52
      %p54 = scmp.ne.s32.totalorder %s40, %s41
      %p55 = scmp.eq.s32.totalorder %s17, 3
      %p56 = por %p54, %p55
      %p58 = scmp.ne.s32.totalorder %s41, %s57
      %p59 = scmp.eq.s32.totalorder %s17, 0
      %p60 = por %p58, %p59
      %s61 = smul.u32 %s18, 2
      %s62 = sadd.s32 %s61, %s19
      %s63 = smul.u32 %s30, 2
      %s64 = sadd.s32 %s63, %s26
      %s65 = ssub.s32 %s62, %s64
      %p66 = scmp.eq.s32.totalorder %s65, 0
      %s68 = sadd.s32 %s67, 1
      %s69 = scalar_select %p66, %s67, %s68
      %p72 = pneg %p66
      %p73 = scmp.eq.s32.totalorder %s11, 3
      %p74 = por %p72, %p73
      %p75 = scmp.ne.s32.totalorder %s67, %s70
      %p76 = scmp.eq.s32.totalorder %s11, 0
      %p77 = por %p75, %p76
      %p78 = scmp.ne.s32.totalorder %s67, %s70
      %p79 = scmp.eq.s32.totalorder %s16, 3
      %p80 = por %p78, %p79
      %p81 = scmp.ne.s32.totalorder %s70, %s71
      %p82 = scmp.eq.s32.totalorder %s16, 0
      %p83 = por %p81, %p82
      %p84 = scmp.ne.s32.totalorder %s70, %s71
      %p85 = scmp.eq.s32.totalorder %s17, 3
      %p86 = por %p84, %p85
      %p88 = scmp.ne.s32.totalorder %s71, %s87
      %p89 = scmp.eq.s32.totalorder %s17, 0
      %p90 = por %p88, %p89
      %s91 = ssub.s32 %s18, %s30
      %p92 = scmp.eq.s32.totalorder %s91, 0
      %s94 = sadd.s32 %s93, 1
      %s95 = scalar_select %p92, %s93, %s94
      %p98 = pneg %p92
      %p99 = scmp.eq.s32.totalorder %s11, 3
      %p100 = por %p98, %p99
      %p101 = scmp.ne.s32.totalorder %s93, %s96
      %p102 = scmp.eq.s32.totalorder %s11, 0
      %p103 = por %p101, %p102
      %p104 = scmp.ne.s32.totalorder %s93, %s96
      %p105 = scmp.eq.s32.totalorder %s16, 3
      %p106 = por %p104, %p105
      %p107 = scmp.ne.s32.totalorder %s96, %s97
      %p108 = scmp.eq.s32.totalorder %s16, 0
      %p109 = por %p107, %p108
      %p110 = scmp.ne.s32.totalorder %s96, %s97
      %p111 = scmp.eq.s32.totalorder %s17, 3
      %p112 = por %p110, %p111
      %p114 = scmp.ne.s32.totalorder %s97, %s113
      %p115 = scmp.eq.s32.totalorder %s17, 0
      %p116 = por %p114, %p115
      %p117 = scmp.le.s32.totalorder 1, %s11
      %p118 = scmp.lt.s32.totalorder %s11, 5
      %p119 = pnand %p117, %p118
      %p120 = pneg %p119
      // Predicated region
      $region9: #{tpu_custom_call.1} parent=5 // pred_check
        _
      $region10: #{tpu_custom_call.1} parent=5 // pred_check_branch
        %122 = sbr.rel (%p119) target = $region12
      $region11: #{tpu_custom_call.1} parent=5 // pred_region
        %s123 = ssub.s32 %s11, 1
      $region12: #{tpu_custom_call.1} parent=5 // pred_fallthru
        _
      %p124 = scmp.lt.s32.totalorder %s11, 4
      // Predicated region
      $region13: #{tpu_custom_call.1} parent=5 // pred_check
        %p125 = pneg %p124
      $region14: #{tpu_custom_call.1} parent=5 // pred_check_branch
        %127 = sbr.rel (%p125) target = $region16
      $region15: #{tpu_custom_call.1} parent=5 // pred_region
        // Predicated region
        $region17: #{tpu_custom_call.1} parent=15 // pred_check
          %p128 = pneg %p47
        $region18: #{tpu_custom_call.1} parent=15 // pred_check_branch
          %130 = sbr.rel (%p128) target = $region20
        $region19: #{tpu_custom_call.1} parent=15 // pred_region
          %s131 = smul.u32 %s18, 2
          %s132 = sadd.s32 %s131, %s19
          %s133 = smul.u32 2, %s132
          %p134 = scmp.lt.s32.totalorder %s133, 7
          %s135 = scalar_select %p134, %s133, 7
          %s136 = smul.addr %s135, 8
          %s137 = scalar_lea.vmem %s0, %s136
          %s138 = smul.u32 %s18, 2
          %s139 = sadd.s32 %s138, %s19
          %s140 = smul.u32 2, %s139
        $region20: #{tpu_custom_call.1} parent=15 // pred_fallthru
          _
        // Predicated region
        $region21: #{tpu_custom_call.1} parent=15 // pred_check
          %p141 = pneg %p77
        $region22: #{tpu_custom_call.1} parent=15 // pred_check_branch
          %143 = sbr.rel (%p141) target = $region24
        $region23: #{tpu_custom_call.1} parent=15 // pred_region
          %s144 = smul.u32 %s18, 2
          %s145 = sadd.s32 %s144, %s19
          %s146 = smul.u32 2, %s145
          %p147 = scmp.lt.s32.totalorder %s146, 7
          %s148 = scalar_select %p147, %s146, 7
          %s149 = smul.addr %s148, 8
          %s150 = scalar_lea.vmem %s1, %s149
          %s151 = smul.u32 %s18, 2
          %s152 = sadd.s32 %s151, %s19
          %s153 = smul.u32 2, %s152
        $region24: #{tpu_custom_call.1} parent=15 // pred_fallthru
          _
      $region16: #{tpu_custom_call.1} parent=5 // pred_fallthru
        _
      %p154 = scmp.le.s32.totalorder 1, %s11
      %p155 = scmp.lt.s32.totalorder %s11, 5
      %p156 = pnand %p154, %p155
      %p157 = pneg %p156
      // Predicated region
      $region25: #{tpu_custom_call.1} parent=5 // pred_check
        _
      $region26: #{tpu_custom_call.1} parent=5 // pred_check_branch
        %159 = sbr.rel (%p156) target = $region28
      $region27: #{tpu_custom_call.1} parent=5 // pred_region
        %s160 = ssub.s32 %s11, 1
        %s161 = smul.u32 %s20, 2
        %s162 = sadd.s32 %s161, %s21
        %s163 = smul.u32 2, %s162
        %p164 = scmp.lt.s32.totalorder %s163, 7
        %s165 = scalar_select %p164, %s163, 7
        %s166 = smul.addr %s165, 8
        %s167 = scalar_lea.vmem %s0, %s166
        %p168 = pneg %p53
        %p169 = pneg %p50
        %s170 = smul.u32 %s20, 2
        %s171 = sadd.s32 %s170, %s21
        %s172 = smul.u32 2, %s171
        %p173 = scmp.lt.s32.totalorder %s172, 7
        %s174 = scalar_select %p173, %s172, 7
        %s175 = smul.addr %s174, 8
        %s176 = scalar_lea.vmem %s1, %s175
        %p177 = pneg %p83
        %p178 = pneg %p80
        %p179 = pneg %p109
        %p180 = pneg %p106
        %s181 = sand.u32 %s96, 1
        %s182 = scalar_lea.sflag [#allocation3], %s181
        %s183 = sand.u32 %s96, 1
        %s184 = smul.addr %s183, 8
        %s185 = scalar_lea.vmem [#allocation2], %s184
        %s186 = smul.u32 %s20, 2
        %s187 = sadd.s32 %s186, %s21
        %s188 = smul.u32 2, %s187
        %p189 = scmp.lt.s32.totalorder %s188, 7
        %s190 = scalar_select %p189, %s188, 7
        %s191 = smul.addr %s190, 8
        %s192 = scalar_lea.vmem %s0, %s191
        %s193 = smul.u32 %s20, 2
        %s194 = sadd.s32 %s193, %s21
        %s195 = smul.u32 2, %s194
        %s196 = smul.u32 %s20, 2
        %s197 = sadd.s32 %s196, %s21
        %s198 = smul.u32 2, %s197
        %p199 = scmp.lt.s32.totalorder %s198, 7
        %s200 = scalar_select %p199, %s198, 7
        %s201 = smul.addr %s200, 8
        %s202 = scalar_lea.vmem %s1, %s201
        %s203 = smul.u32 %s20, 2
        %s204 = sadd.s32 %s203, %s21
        %s205 = smul.u32 2, %s204
        %v206 = vld [vmem:[%s192] sm:$0xff]
        %v207 = vld [vmem:[%s192 + $0x8] sm:$0xff]
        %v208 = vld [vmem:[%s202] sm:$0xff]
        %v209 = vld [vmem:[%s202 + $0x8] sm:$0xff]
        %vm210 = vcmask 31744
        %v211 = vsel %vm210, %v206, -inf
        %212 = vmax.xlane.f32.xlu0 %v211
        %v213 = vpop.xlane.xlu0 %212
        %v214 = vsel %vm210, %v207, -inf
        %215 = vmax.xlane.f32.xlu0 %v214
        %v216 = vpop.xlane.xlu0 %215
        %v217 = vsub.f32 %v206, %v213
        %v218 = vsub.f32 %v207, %v216
        %v219 = vmul.f32 %v217, 1.442695
        %v220 = vpow.pop %v219
        %v221 = vmul.f32 %v218, 1.442695
        %v222 = vpow.pop %v221
        %v223 = vsel %vm210, %v220, 0.0
        %224 = vadd.xlane.f32.xlu0 %v223
        %v225 = vpop.xlane.xlu0 %224
        %v226 = vsel %vm210, %v222, 0.0
        %227 = vadd.xlane.f32.xlu0 %v226
        %v228 = vpop.xlane.xlu0 %227
        %v229 = vlog2.pop %v225
        %v230 = vmul.f32 %v229, 0.6931472
        %v231 = vlog2.pop %v228
        %v232 = vmul.f32 %v231, 0.6931472
        %v233 = vadd.f32 %v213, %v230
        %v234 = vadd.f32 %v216, %v232
        %v235 = vsub.f32 %v233, %v208
        %v236 = vsub.f32 %v234, %v209
        %v237 = vsub.f32 0.0, %v235
        %v238 = vsub.f32 0.0, %v236
        %v239 = vmul.f32 %v237, 1.442695
        %v240 = vpow.pop %v239
        %v241 = vmul.f32 %v238, 1.442695
        %v242 = vpow.pop %v241
        %v243 = vsub.f32 1.0, %v240
        %v244 = vsub.f32 1.0, %v242
        %v245 = vmul.f32 %v243, %v243
        %v246 = vmul.f32 %v244, %v244
        %249 = vrot.lane.b32.xlu0 %v245, 127
        %v250 = vpop.permute.xlu0 %249
        %251 = vrot.lane.b32.xlu0 %v246, 127
        %v252 = vpop.permute.xlu0 %251
        %v255 = vmul.f32 %v208, %v250
        %v256 = vmul.f32 %v209, %v252
        %259 = vrot.lane.b32.xlu0 %v235, 127
        %v260 = vpop.permute.xlu0 %259
        %261 = vrot.lane.b32.xlu0 %v236, 127
        %v262 = vpop.permute.xlu0 %261
        %v265 = vmul.f32 %v255, %v260
        %v266 = vmul.f32 %v256, %v262
        %s267 = smul.u32 %s20, 2
        %s268 = sadd.s32 %s267, %s21
        %s269 = smul.u32 %s268, 16
        %v270 = vlaneseq
        %v271 = vshrl.u32 %v270, 7
        %v272 = vadd.s32 %v271, 8
        %v273 = vstv %s269
        %v274 = vadd.s32 %v273, %v271
        %v275 = vadd.s32 %v273, %v272
        %vm276 = vcmp.lt.s32.totalorder %v274, 40
        %vm277 = vcmp.lt.s32.totalorder %v275, 40
        %v278 = vsel %vm276, %v265, 0.0
        %v279 = vsel %vm277, %v266, 0.0
        %p280 = scmp.eq.s32.totalorder %s21, 0
        // Predicated region
        $region29: #{tpu_custom_call.1} parent=27 // pred_check
          %p281 = pneg %p280
        $region30: #{tpu_custom_call.1} parent=27 // pred_check_branch
          %283 = sbr.rel (%p281) target = $region32
        $region31: #{tpu_custom_call.1} parent=27 // pred_region
          %284 = vst [vmem:[%s185] sm:$0xff] 0.0
        $region32: #{tpu_custom_call.1} parent=27 // pred_fallthru
          _
        %v285 = vld [vmem:[%s185] sm:$0xff]
        %vm286 = vcmask 7168
        %v287 = vsel %vm286, %v278, 0.0
        %v288 = vsel %vm286, %v279, 0.0
        %v289 = vadd.f32 %v287, %v288
        %290 = vadd.xlane.f32.xlu0 %v289
        %v291 = vpop.xlane.xlu0 %290
        %v292 = vrot.slane %v291, 4
        %v293 = vadd.f32 %v291, %v292
        %v294 = vrot.slane %v293, 2
        %v295 = vadd.f32 %v293, %v294
        %v296 = vrot.slane %v295, 1
        %v297 = vadd.f32 %v295, %v296
        %s298 = vtos %v297
        %v299 = vstv %s298
        %v300 = vadd.f32 %v285, %v299
        %301 = vst [vmem:[%s185] sm:$0xff] %v300
        %s302 = sand.u32 %s96, 1
        %s303 = scalar_lea.sflag [#allocation3], %s302
        %s304 = sand.u32 %s96, 1
        %s305 = smul.addr %s304, 8
        %s306 = scalar_lea.vmem [#allocation2], %s305
        // Predicated region
        $region33: #{tpu_custom_call.1} parent=27 // pred_check
          %p307 = pneg %p106
        $region34: #{tpu_custom_call.1} parent=27 // pred_check_branch
          %309 = sbr.rel (%p307) target = $region36
        $region35: #{tpu_custom_call.1} parent=27 // pred_region
          %311 = vsyncadd %s303, 0
          %s312 = smul.addr %s20, 8
          %s313 = scalar_lea.hbm %s2, %s312
          %s315 = sshll.u32 %s306, 4
          %s316 = int_to_ptr.vmem [resolvable:$true] %s315
          %s317 = sshll.u32 %s313, 4
          %s318 = int_to_ptr.hbm [resolvable:$true] %s317
          %320 = dma.vmem_to_hbm [thread:$0]  %s316, 128, %s318, %s303
        $region36: #{tpu_custom_call.1} parent=27 // pred_fallthru
          _
      $region28: #{tpu_custom_call.1} parent=5 // pred_fallthru
        _
      %p321 = scmp.le.s32.totalorder 2, %s11
      // Predicated region
      $region37: #{tpu_custom_call.1} parent=5 // pred_check
        %p322 = pneg %p321
      $region38: #{tpu_custom_call.1} parent=5 // pred_check_branch
        %324 = sbr.rel (%p322) target = $region40
      $region39: #{tpu_custom_call.1} parent=5 // pred_region
        %s325 = ssub.s32 %s11, 2
        // Predicated region
        $region41: #{tpu_custom_call.1} parent=39 // pred_check
          %p326 = pneg %p112
        $region42: #{tpu_custom_call.1} parent=39 // pred_check_branch
          %328 = sbr.rel (%p326) target = $region44
        $region43: #{tpu_custom_call.1} parent=39 // pred_region
          %s329 = sand.u32 %s97, 1
          %s330 = scalar_lea.sflag [#allocation3], %s329
          %s331 = sand.u32 %s97, 1
          %s332 = smul.addr %s331, 8
          %s333 = scalar_lea.vmem [#allocation2], %s332
          %335 = dma.done %s330, 128
        $region44: #{tpu_custom_call.1} parent=39 // pred_fallthru
          _
      $region40: #{tpu_custom_call.1} parent=5 // pred_fallthru
        _
    $region6: #{tpu_custom_call.1} parent=1 // loop_footer
      %s15 = sadd.s32 1, %s11
    $region7: #{tpu_custom_call.1} parent=1 // loop_footer_branch
      %10 = sbr.rel target = $region3
    $region8: #{tpu_custom_call.1} parent=1 // loop_exit
      _
    %336 = vsyncpa [#allocation3], 1
    %s337 = scalar_lea.sflag [#allocation3], 1
    %338 = vsyncpa %s337, 1

</llo_original>
